<compile_context>
chip_gen: v7x
topology: tpu7x:2x2x1
jax: 0.10.0
libtpu: 0.0.40
codegen_flags: <defaults>
</compile_context>

<pallas_src>
import functools

import jax
import jax.numpy as jnp
from jax.experimental import pallas as pl
from jax.experimental.pallas import tpu as pltpu


def _rope_kernel(inv_freq_ref, lane_pos_ref, out_ref, *, rows_per_pack, offset,
                 interp_scale):
    """Pure broadcast-multiply RoPE frequency table.

    inv_freq_ref : (1, K*D) f32   duplicated/tiled inv_freq (lane table)
    lane_pos_ref : (1, K*D) i32   lane -> extra sequence offset (l // D)
    out_ref      : (TILE_R, K*D) f32
    out[r, l] = scale * (global_row*K + l//D + offset) * inv_freq_full[l % D]
    """
    tr, kd = out_ref.shape
    # Base (integer) position for this tile.
    base = pl.program_id(0) * (tr * rows_per_pack) + offset            # i32 scalar
    row_i = jax.lax.broadcasted_iota(jnp.int32, (tr, kd), 0) * rows_per_pack
    seq_i = row_i + lane_pos_ref[...] + base                           # exact int32 positions
    seq = seq_i.astype(jnp.float32)
    if interp_scale is not None:
        seq = seq * jnp.float32(interp_scale)
    out_ref[...] = seq * inv_freq_ref[...]                             # VPU broadcast-mul


def rotary_embedding_forward(
    inv_freq: jax.Array,
    max_seq_len: int,
    offset: int = 0,
    seq_len_interpolation_factor=None,
    rotary_interleaved: bool = False,
) -> jax.Array:
    """Returns RoPE embeddings of shape [max_seq_len, 1, 1, dim] (float32)."""
    half = inv_freq.shape[0]
    dim = 2 * half
    inv_freq = inv_freq.astype(jnp.float32)

    # Host-side duplication of inv_freq -> full rotary dim (no in-kernel concat).
    if rotary_interleaved:
        inv_freq_full = jnp.repeat(inv_freq, 2)            # [f0,f0,f1,f1,...]
    else:
        inv_freq_full = jnp.concatenate([inv_freq, inv_freq])  # [f0..f_{h-1},f0..]

    # Lane packing: fold k sequence rows into the lane axis when dim < 128.
    if dim < 128 and 128 % dim == 0 and max_seq_len % (128 // dim) == 0:
        k = 128 // dim
    else:
        k = 1
    kd = k * dim
    rows = max_seq_len // k

    inv_freq_packed = jnp.tile(inv_freq_full, k).reshape(1, kd)
    lane_pos = (jnp.arange(kd, dtype=jnp.int32) // dim).reshape(1, kd)

    # Tile the (packed) sequence axis: ~1 MiB output blocks, double-buffered.
    bytes_per_row = kd * 4
    tile_r_cap = max(8, ((1 << 20) // bytes_per_row) // 8 * 8)
    tile_r = rows if rows <= tile_r_cap else tile_r_cap
    grid = (pl.cdiv(rows, tile_r),)

    interp_scale = (None if seq_len_interpolation_factor is None
                    else 1.0 / seq_len_interpolation_factor)

    kernel = functools.partial(
        _rope_kernel,
        rows_per_pack=k,
        offset=int(offset),
        interp_scale=interp_scale,
    )

    emb_packed = pl.pallas_call(
        kernel,
        out_shape=jax.ShapeDtypeStruct((rows, kd), jnp.float32),
        grid=grid,
        in_specs=[
            pl.BlockSpec((1, kd), lambda i: (0, 0)),   # inv_freq (lane table)
            pl.BlockSpec((1, kd), lambda i: (0, 0)),   # lane position offsets
        ],
        out_specs=pl.BlockSpec((tile_r, kd), lambda i: (i, 0)),
        compiler_params=pltpu.CompilerParams(
            dimension_semantics=("parallel",)),
        cost_estimate=pl.CostEstimate(
            flops=2 * rows * kd,
            transcendentals=0,
            bytes_accessed=rows * kd * 4 + 2 * kd * 4),
    )(inv_freq_packed, lane_pos)

    # [rows, k*D] is a row-major view of [S, D]; add broadcast dims for free.
    return emb_packed.reshape(max_seq_len, 1, 1, dim)


def _rope_reference(inv_freq, max_seq_len, offset, interp, interleaved):
    seq = jnp.arange(max_seq_len, dtype=jnp.float32) + offset
    if interp is not None:
        seq = seq * (1.0 / interp)
    freqs = jnp.outer(seq, inv_freq.astype(jnp.float32))
    if not interleaved:
        emb = jnp.concatenate([freqs, freqs], axis=-1)
    else:
        emb = jnp.stack([freqs, freqs], axis=-1).reshape(max_seq_len, -1)
    return emb[:, None, None, :]


if __name__ == "__main__":
    _ = jax.random.PRNGKey(0)  # inputs are deterministic by construction
    rotary_base = 10000.0

    def make_inv_freq(rotary_dim):
        exponents = jnp.arange(0, rotary_dim, 2, dtype=jnp.float32) / rotary_dim
        return 1.0 / (rotary_base ** exponents)

    cases = [
        # (rotary_dim, max_seq_len, offset, interp_factor, interleaved)
        (32, 8, 0, None, False),    # small, lane-packed (k=4), non-interleaved
        (64, 64, 3, 2.0, True),     # lane-packed (k=2), interleaved + offset + interp
        (128, 32, 5, None, False),  # already lane-dense (k=1)
    ]

    for rotary_dim, max_seq_len, offset, interp, interleaved in cases:
        inv_freq = make_inv_freq(rotary_dim)
        emb = rotary_embedding_forward(
            inv_freq,
            max_seq_len=max_seq_len,
            offset=offset,
            seq_len_interpolation_factor=interp,
            rotary_interleaved=interleaved,
        )
        emb = jax.block_until_ready(emb)
        ref = _rope_reference(inv_freq, max_seq_len, offset, interp, interleaved)
        assert emb.shape == (max_seq_len, 1, 1, rotary_dim), emb.shape
        assert jnp.allclose(emb, ref, atol=1e-5, rtol=1e-5), (
            f"mismatch for case dim={rotary_dim} S={max_seq_len}")

    print("KERNEL_OK")
</pallas_src>

<mosaic_0001>
module attributes {stable_mosaic.version = 11 : i64} {
  func.func @_rope_kernel(%arg0: i32, %arg1: memref<1x128xf32, #tpu.memory_space<vmem>>, %arg2: memref<1x128xi32, #tpu.memory_space<vmem>>, %arg3: memref<2x128xf32, #tpu.memory_space<vmem>>) attributes {dimension_semantics = [#tpu.dimension_semantics<parallel>], iteration_bounds = array<i64: 1>, scalar_prefetch = 0 : i64, scratch_operands = 0 : i64, tpu.core_type = #tpu.core_type<tc>, window_params = [{pipeline_mode = #tpu.pipeline_mode<synchronous>, transform_indices = @transform_0, window_bounds = array<i64: 1, 128>}, {pipeline_mode = #tpu.pipeline_mode<synchronous>, transform_indices = @transform_1, window_bounds = array<i64: 1, 128>}, {transform_indices = @transform_2, window_bounds = array<i64: 2, 128>}]} {
    %c8_i32 = arith.constant 8 : i32
    %0 = arith.muli %arg0, %c8_i32 : i32
    %c0_i32 = arith.constant 0 : i32
    %1 = arith.addi %0, %c0_i32 : i32
    %2 = tpu.iota {dimensions = array<i32: 0>} : vector<2x128xi32>
    %c4_i32 = arith.constant 4 : i32
    %3 = vector.broadcast %c4_i32 : i32 to vector<2x128xi32>
    %4 = arith.muli %2, %3 : vector<2x128xi32>
    %c0 = arith.constant 0 : index
    %c0_0 = arith.constant 0 : index
    %5 = vector.load %arg2[%c0, %c0_0] : memref<1x128xi32, #tpu.memory_space<vmem>>, vector<1x128xi32>
    %6 = vector.broadcast %5 : vector<1x128xi32> to vector<2x128xi32>
    %7 = arith.addi %4, %6 : vector<2x128xi32>
    %8 = vector.broadcast %1 : i32 to vector<2x128xi32>
    %9 = arith.addi %7, %8 : vector<2x128xi32>
    %10 = arith.sitofp %9 : vector<2x128xi32> to vector<2x128xf32>
    %c0_1 = arith.constant 0 : index
    %c0_2 = arith.constant 0 : index
    %11 = vector.load %arg1[%c0_1, %c0_2] : memref<1x128xf32, #tpu.memory_space<vmem>>, vector<1x128xf32>
    %12 = vector.broadcast %11 : vector<1x128xf32> to vector<2x128xf32>
    %13 = arith.mulf %10, %12 : vector<2x128xf32>
    %c0_3 = arith.constant 0 : index
    %c0_4 = arith.constant 0 : index
    %14 = vector.load %arg3[%c0_3, %c0_4] : memref<2x128xf32, #tpu.memory_space<vmem>>, vector<2x128xf32>
    tpu.vector_store %arg3[%c0_3, %c0_4], %13 {strides = array<i32>} : memref<2x128xf32, #tpu.memory_space<vmem>>, vector<2x128xf32>,
    return
  }
  func.func @transform_0(%arg0: i32) -> (i32, i32) {
    %c0_i32 = arith.constant 0 : i32
    %c0_i32_0 = arith.constant 0 : i32
    %c0_i32_1 = arith.constant 0 : i32
    return %c0_i32, %c0_i32_0 : i32, i32
  }
  func.func @transform_1(%arg0: i32) -> (i32, i32) {
    %c0_i32 = arith.constant 0 : i32
    %c0_i32_0 = arith.constant 0 : i32
    %c0_i32_1 = arith.constant 0 : i32
    return %c0_i32, %c0_i32_0 : i32, i32
  }
  func.func @transform_2(%arg0: i32) -> (i32, i32) {
    %c0_i32 = arith.constant 0 : i32
    %c0_i32_0 = arith.constant 0 : i32
    return %arg0, %c0_i32 : i32, i32
  }
}

</mosaic_0001>

<llo_original>
// kernel: tpu_custom_call.1
$region0: #{tpu_custom_call.1}
  #allocation0 [shape = 'u32[]', space=smem, size = 0x4, offset = 0x4, fixed_abs, tag = 'smem constant byte address 0x4 - core index']
  #allocation1 [shape = 'u32[144,128]{1,0:T(1,128)}', space=vmem, size = 0x12000, scoped, tag = 'internal scratch']
  %s0 = inlined_call_operand.hbm [shape: f32[1,128], index: 0, kind: input, shape index: {}]
  %s1 = inlined_call_operand.vmem [shape: s32[1,128], index: 1, kind: input, shape index: {}]
  %s2 = inlined_call_operand.hbm [shape: f32[2,128], index: 2, kind: output, shape index: {}]
  %s3 = sld [smem:[#allocation0]]
  $region22: #{tpu_custom_call.1} parent=0
    _
  %s5 = ssub.s32 1, %s3
  %s6 = scalar_select 0, %s5, %s3
  $region1: #{tpu_custom_call.1} parent=0
    #allocation2 [shape = 'u8[512]{0}', space=vmem, size = 0x400, scoped, tag = 'input window, operand 0, single buffered']
    #allocation3 [shape = 's32[1]{0}', space=sflag, size = 0x4, scoped, tag = 'scoped memory for tpu_custom_call.1']
    #allocation4 [shape = 's32[1]{0}', space=sflag, size = 0x4, scoped, tag = 'scoped memory for tpu_custom_call.1']
    #allocation5 [shape = 'u8[1024]{0}', space=vmem, size = 0x400, scoped, tag = 'output window, operand 0, single buffered']
    %7 = vsyncpa [#allocation3], 0
    %8 = vsyncpa [#allocation4], 0
    // Predicated region
    $region2: #{tpu_custom_call.1} parent=1 // pred_check
      _
    $region3: #{tpu_custom_call.1} parent=1 // pred_check_branch
      %10 = sbr.rel (0) target = $region5
    $region4: #{tpu_custom_call.1} parent=1 // pred_region
      %s12 = ssub.s32 16, 16
      %13 = vsyncadd [#allocation3], %s12
      %s15 = sshll.u32 [#allocation2], 4
      %s16 = int_to_ptr.vmem [resolvable:$true] %s15
      %18 = dma.hbm_to_vmem [thread:$0]  %s0, 16, %s16, [#allocation3]
    $region5: #{tpu_custom_call.1} parent=1 // pred_fallthru
      _
    // Predicated region
    $region6: #{tpu_custom_call.1} parent=1 // pred_check
      _
    $region7: #{tpu_custom_call.1} parent=1 // pred_check_branch
      %20 = sbr.rel (0) target = $region9
    $region8: #{tpu_custom_call.1} parent=1 // pred_region
      _
    $region9: #{tpu_custom_call.1} parent=1 // pred_fallthru
      _
    // Predicated region
    $region10: #{tpu_custom_call.1} parent=1 // pred_check
      _
    $region11: #{tpu_custom_call.1} parent=1 // pred_check_branch
      %22 = sbr.rel (0) target = $region13
    $region12: #{tpu_custom_call.1} parent=1 // pred_region
      %23 = dma.done [#allocation3], 16
    $region13: #{tpu_custom_call.1} parent=1 // pred_fallthru
      _
    %s24 = smul.u32 0, 8
    %v25 = vlaneseq
    %v26 = vshrl.u32 %v25, 7
    %v27 = vmul.u32 %v26, 4
    %v28 = vld [vmem:[%s1] sm:$0x1]
    %v29 = vlaneseq
    %v30 = vshrl.u32 %v29, 7
    %v31 = vsub.s32 0, %v30
    %v32 = vrot.slane %v28, %v31
    %v33 = vadd.s32 %v27, %v32
    %v34 = vstv %s24
    %v35 = vadd.s32 %v33, %v34
    %v36 = vcvt.s32.f32 %v35
    %v37 = vld [vmem:[#allocation2] sm:$0x1]
    %v39 = vlaneseq
    %v40 = vshrl.u32 %v39, 7
    %v41 = vsub.s32 0, %v40
    %v42 = vrot.slane %v37, %v41
    %v44 = vmul.f32 %v36, %v42
    %45 = vst [vmem:[#allocation5] sm:$0x3] %v44
    // Predicated region
    $region14: #{tpu_custom_call.1} parent=1 // pred_check
      _
    $region15: #{tpu_custom_call.1} parent=1 // pred_check_branch
      %47 = sbr.rel (0) target = $region17
    $region16: #{tpu_custom_call.1} parent=1 // pred_region
      %s49 = ssub.s32 32, 32
      %50 = vsyncadd [#allocation4], %s49
      %s52 = sshll.u32 [#allocation5], 4
      %s53 = int_to_ptr.vmem [resolvable:$true] %s52
      %55 = dma.vmem_to_hbm [thread:$0]  %s53, 32, %s2, [#allocation4]
    $region17: #{tpu_custom_call.1} parent=1 // pred_fallthru
      _
    // Predicated region
    $region18: #{tpu_custom_call.1} parent=1 // pred_check
      _
    $region19: #{tpu_custom_call.1} parent=1 // pred_check_branch
      %57 = sbr.rel (0) target = $region21
    $region20: #{tpu_custom_call.1} parent=1 // pred_region
      %58 = dma.done [#allocation4], 32
    $region21: #{tpu_custom_call.1} parent=1 // pred_fallthru
      _
    %59 = vsyncpa [#allocation3], 1
    %60 = vsyncpa [#allocation4], 1

</llo_original>
